<compile_context>
chip_gen: v7x
topology: tpu7x:2x2x1
jax: 0.10.0
libtpu: 0.0.40
codegen_flags: <defaults>
</compile_context>

<pallas_src>
import functools

import jax
import jax.numpy as jnp
from jax.experimental import pallas as pl
from jax.experimental.pallas import tpu as pltpu


def mlp_kernel(x_ref, w1_ref, b1_ref, w2_ref, b2_ref, o_ref):
    # x_ref : (TB, in)  -- natural PyTorch layout; relayout happens on-chip
    # w1_ref: (H, in)   -- PyTorch linear1.weight layout, VMEM-resident
    # b1_ref: (H, 1)
    # w2_ref: (H, 1)    -- linear2.weight as a column
    # b2_ref: (1, 1)    -- scalar bias in SMEM
    # o_ref : (1, TB)   -- lane-dense output block (full-width vst)
    #
    # First layer on the MXU, contracting x's LAST dim (i.e. rhs transposed),
    # so the hidden activation comes out batch-on-lanes: (H, TB).
    h = jax.lax.dot_general(
        w1_ref[...], x_ref[...],
        dimension_numbers=(((1,), (1,)), ((), ())),
        preferred_element_type=jnp.float32,
        precision=jax.lax.Precision.HIGHEST,
    )
    h = jnp.maximum(h + b1_ref[...], 0.0)                 # bias + ReLU on the VPU
    # Second layer: lane-parallel multiply (VPU) + sublane reduction (XLU)
    # instead of an (H, 1) MXU matmul.
    z = jnp.sum(h * w2_ref[...], axis=0, keepdims=True)   # (1, TB)
    z = z + b2_ref[0, 0]
    o_ref[...] = jax.nn.sigmoid(z).astype(o_ref.dtype)    # EUP


@functools.partial(jax.jit, static_argnames=("tb",))
def neural_network2(x, w1, b1, w2, b2, *, tb=16384):
    """Forward pass of NeuralNetwork2.

    x : (B, in) float32
    w1: (H, in)  (PyTorch linear1.weight)   b1: (H,)  (linear1.bias)
    w2: (1, H)   (PyTorch linear2.weight)   b2: (1,)  (linear2.bias)
    returns (B, 1) float32
    """
    B, in_size = x.shape
    H = w1.shape[0]

    # No transpose, no pad: x stays (B, in); only a cast (fused under jit).
    x_f = x.astype(jnp.float32)
    w1m = w1.astype(jnp.float32)                     # (H, in)
    b1c = b1.reshape(H, 1).astype(jnp.float32)       # (H, 1)
    w2c = w2.reshape(1, H).T.astype(jnp.float32)     # (H, 1)
    b2s = b2.reshape(1, 1).astype(jnp.float32)       # (1, 1) -> SMEM scalar

    # Batch tile selection: lane-aligned, big enough to amortize the per-step
    # overhead, small enough for VMEM (x tile is lane-padded 16 -> 128).
    tb = max(128, (int(tb) // 128) * 128)
    if B <= tb:
        TB = B                                       # single full-array block
    else:
        TB = tb
        # Keep >= 4 grid steps when possible so each TC (v7x megacore) gets
        # at least 2 pipelined steps along the "parallel" batch axis.
        while TB > 128 and pl.cdiv(B, TB) < 4:
            TB = max(128, (TB // 2) // 128 * 128)
    grid = (pl.cdiv(B, TB),)                         # ragged last block masked

    out_t = pl.pallas_call(
        mlp_kernel,
        out_shape=jax.ShapeDtypeStruct((1, B), jnp.float32),
        grid_spec=pltpu.PrefetchScalarGridSpec(
            num_scalar_prefetch=0,
            grid=grid,
            in_specs=[
                pl.BlockSpec((TB, in_size), lambda i: (i, 0)),      # x tile (pipelined)
                pl.BlockSpec((H, in_size), lambda i: (0, 0)),       # w1 resident
                pl.BlockSpec((H, 1), lambda i: (0, 0)),             # b1 resident
                pl.BlockSpec((H, 1), lambda i: (0, 0)),             # w2 resident
                pl.BlockSpec(memory_space=pltpu.MemorySpace.SMEM),  # b2 scalar
            ],
            out_specs=pl.BlockSpec((1, TB), lambda i: (0, i)),      # lane-dense out
        ),
        compiler_params=pltpu.CompilerParams(
            dimension_semantics=("parallel",),        # batch axis -> both TCs
            vmem_limit_bytes=40 * 1024 * 1024,        # covers big tiles on v5e
        ),
    )(x_f, w1m, b1c, w2c, b2s)

    return out_t.T                                    # back to PyTorch's (B, 1)


if __name__ == "__main__":
    input_size, hidden_size = 16, 32

    key = jax.random.PRNGKey(0)
    kx, kw1, kb1, kw2, kb2, kx2 = jax.random.split(key, 6)

    # Deterministic synthetic parameters in PyTorch Linear layout / scale.
    lim1 = 1.0 / (input_size ** 0.5)
    lim2 = 1.0 / (hidden_size ** 0.5)
    w1 = jax.random.uniform(kw1, (hidden_size, input_size), jnp.float32, -lim1, lim1)
    b1 = jax.random.uniform(kb1, (hidden_size,), jnp.float32, -lim1, lim1)
    w2 = jax.random.uniform(kw2, (1, hidden_size), jnp.float32, -lim2, lim2)
    b2 = jax.random.uniform(kb2, (1,), jnp.float32, -lim2, lim2)

    def ref_fwd(xin):
        h = jnp.maximum(
            jnp.dot(xin, w1.T, precision=jax.lax.Precision.HIGHEST) + b1, 0.0)
        return jax.nn.sigmoid(
            jnp.dot(h, w2.T, precision=jax.lax.Precision.HIGHEST) + b2)

    # Small batch: single full-array block.
    x_small = jax.random.normal(kx, (8, input_size), dtype=jnp.float32)
    out_small = neural_network2(x_small, w1, b1, w2, b2)
    jax.block_until_ready(out_small)
    assert out_small.shape == (8, 1)
    assert jnp.allclose(out_small, ref_fwd(x_small), atol=1e-5, rtol=1e-5)

    # Non-multiple batch with a small tile: exercises the multi-step "parallel"
    # batch grid and Pallas' ragged last-block masking (no host-side pad).
    x_big = jax.random.normal(kx2, (300, input_size), dtype=jnp.float32)
    out_big = neural_network2(x_big, w1, b1, w2, b2, tb=128)
    jax.block_until_ready(out_big)
    assert out_big.shape == (300, 1)
    assert jnp.allclose(out_big, ref_fwd(x_big), atol=1e-5, rtol=1e-5)

    print("KERNEL_OK")
</pallas_src>

<mosaic_0001>
module attributes {stable_mosaic.version = 11 : i64} {
  func.func @mlp_kernel(%arg0: i32, %arg1: memref<8x16xf32, #tpu.memory_space<vmem>>, %arg2: memref<32x16xf32, #tpu.memory_space<vmem>>, %arg3: memref<32x1xf32, #tpu.memory_space<vmem>>, %arg4: memref<32x1xf32, #tpu.memory_space<vmem>>, %arg5: memref<1x1xf32, #tpu.memory_space<smem>>, %arg6: memref<1x8xf32, #tpu.memory_space<vmem>>) attributes {dimension_semantics = [#tpu.dimension_semantics<parallel>], iteration_bounds = array<i64: 1>, scalar_prefetch = 0 : i64, scratch_operands = 0 : i64, tpu.core_type = #tpu.core_type<tc>, window_params = [{transform_indices = @transform_0, window_bounds = array<i64: 8, 16>}, {pipeline_mode = #tpu.pipeline_mode<synchronous>, transform_indices = @transform_1, window_bounds = array<i64: 32, 16>}, {pipeline_mode = #tpu.pipeline_mode<synchronous>, transform_indices = @transform_2, window_bounds = array<i64: 32, 1>}, {pipeline_mode = #tpu.pipeline_mode<synchronous>, transform_indices = @transform_3, window_bounds = array<i64: 32, 1>}, {transform_indices = @transform_4, window_bounds = array<i64: 1, 1>}, {transform_indices = @transform_5, window_bounds = array<i64: 1, 8>}]} {
    %c0 = arith.constant 0 : index
    %c0_0 = arith.constant 0 : index
    %0 = vector.load %arg2[%c0, %c0_0] : memref<32x16xf32, #tpu.memory_space<vmem>>, vector<32x16xf32>
    %c0_1 = arith.constant 0 : index
    %c0_2 = arith.constant 0 : index
    %1 = vector.load %arg1[%c0_1, %c0_2] : memref<8x16xf32, #tpu.memory_space<vmem>>, vector<8x16xf32>
    %cst = arith.constant dense<0.000000e+00> : vector<32x8xf32>
    %2 = tpu.matmul %0, %1, %cst {dimension_numbers = #tpu.dot_dimension_numbers<[1], [1], [0], [0], [0, 0, 1, 0], [], []>, precision = #tpu.contract_precision<fp32>} : vector<32x16xf32>, vector<8x16xf32>, vector<32x8xf32> -> vector<32x8xf32>
    %c0_3 = arith.constant 0 : index
    %c0_4 = arith.constant 0 : index
    %3 = vector.load %arg3[%c0_3, %c0_4] : memref<32x1xf32, #tpu.memory_space<vmem>>, vector<32x1xf32>
    %4 = vector.broadcast %3 : vector<32x1xf32> to vector<32x8xf32>
    %5 = arith.addf %2, %4 : vector<32x8xf32>
    %cst_5 = arith.constant 0.000000e+00 : f32
    %6 = vector.broadcast %cst_5 : f32 to vector<32x8xf32>
    %7 = arith.maximumf %5, %6 : vector<32x8xf32>
    %c0_6 = arith.constant 0 : index
    %c0_7 = arith.constant 0 : index
    %8 = vector.load %arg4[%c0_6, %c0_7] : memref<32x1xf32, #tpu.memory_space<vmem>>, vector<32x1xf32>
    %9 = vector.broadcast %8 : vector<32x1xf32> to vector<32x8xf32>
    %10 = arith.mulf %7, %9 : vector<32x8xf32>
    %cst_8 = arith.constant dense<0.000000e+00> : vector<8xf32>
    %11 = vector.multi_reduction <add>, %10, %cst_8 [0] : vector<32x8xf32> to vector<8xf32>
    %12 = vector.shape_cast %11 : vector<8xf32> to vector<1x8xf32>
    %c0_9 = arith.constant 0 : index
    %c0_10 = arith.constant 0 : index
    %13 = memref.load %arg5[%c0_9, %c0_10] : memref<1x1xf32, #tpu.memory_space<smem>>
    %14 = vector.broadcast %13 : f32 to vector<1x8xf32>
    %15 = arith.addf %12, %14 : vector<1x8xf32>
    %16 = arith.negf %15 : vector<1x8xf32>
    %17 = math.exp %16 : vector<1x8xf32>
    %cst_11 = arith.constant 1.000000e+00 : f32
    %18 = vector.broadcast %cst_11 : f32 to vector<1x8xf32>
    %19 = arith.addf %18, %17 : vector<1x8xf32>
    %20 = arith.divf %18, %19 : vector<1x8xf32>
    %c0_12 = arith.constant 0 : index
    %c0_13 = arith.constant 0 : index
    %21 = vector.load %arg6[%c0_12, %c0_13] : memref<1x8xf32, #tpu.memory_space<vmem>>, vector<1x8xf32>
    tpu.vector_store %arg6[%c0_12, %c0_13], %20 {strides = array<i32>} : memref<1x8xf32, #tpu.memory_space<vmem>>, vector<1x8xf32>,
    return
  }
  func.func @transform_0(%arg0: i32) -> (i32, i32) {
    %c0_i32 = arith.constant 0 : i32
    %c0_i32_0 = arith.constant 0 : i32
    return %arg0, %c0_i32 : i32, i32
  }
  func.func @transform_1(%arg0: i32) -> (i32, i32) {
    %c0_i32 = arith.constant 0 : i32
    %c0_i32_0 = arith.constant 0 : i32
    %c0_i32_1 = arith.constant 0 : i32
    return %c0_i32, %c0_i32_0 : i32, i32
  }
  func.func @transform_2(%arg0: i32) -> (i32, i32) {
    %c0_i32 = arith.constant 0 : i32
    %c0_i32_0 = arith.constant 0 : i32
    %c0_i32_1 = arith.constant 0 : i32
    return %c0_i32, %c0_i32_0 : i32, i32
  }
  func.func @transform_3(%arg0: i32) -> (i32, i32) {
    %c0_i32 = arith.constant 0 : i32
    %c0_i32_0 = arith.constant 0 : i32
    %c0_i32_1 = arith.constant 0 : i32
    return %c0_i32, %c0_i32_0 : i32, i32
  }
  func.func @transform_4(%arg0: i32) -> (i32, i32) {
    %c0_i32 = arith.constant 0 : i32
    %c0_i32_0 = arith.constant 0 : i32
    %c0_i32_1 = arith.constant 0 : i32
    return %c0_i32, %c0_i32_0 : i32, i32
  }
  func.func @transform_5(%arg0: i32) -> (i32, i32) {
    %c0_i32 = arith.constant 0 : i32
    %c0_i32_0 = arith.constant 0 : i32
    return %c0_i32, %arg0 : i32, i32
  }
}

</mosaic_0001>

<llo_original>
// kernel: neural_network2.1
$region0: #{neural_network2.1}
  #allocation0 [shape = 'u32[]', space=smem, size = 0x4, offset = 0x4, fixed_abs, tag = 'smem constant byte address 0x4 - core index']
  #allocation1 [shape = 'u32[144,128]{1,0:T(1,128)}', space=vmem, size = 0x12000, scoped, tag = 'internal scratch']
  #allocation2 [shape = 'f32[1,1]{1,0:T(1,128)S(6)}', space=smem, size = 0x200, scoped, tag = 'scoped memory for neural_network2.1']
  %s0 = inlined_call_operand.vmem [shape: f32[8,16], index: 0, kind: input, shape index: {}]
  %s1 = inlined_call_operand.vmem [shape: f32[32,16], index: 1, kind: input, shape index: {}]
  %s2 = inlined_call_operand.vmem [shape: f32[32,1], index: 2, kind: input, shape index: {}]
  %s3 = inlined_call_operand.vmem [shape: f32[32,1], index: 3, kind: input, shape index: {}]
  %s4 = inlined_call_operand.<no memory space> [shape: f32[1,1], index: 4, kind: input, shape index: {}]
  %s5 = inlined_call_operand.hbm [shape: f32[1,8], index: 5, kind: output, shape index: {}]
  %s6 = sld [smem:[#allocation0]]
  $region30: #{neural_network2.1} parent=0
    _
  %s8 = ssub.s32 1, %s6
  %s9 = scalar_select 0, %s8, %s6
  %10 = sst [smem:[#allocation2]] %s4
  $region1: #{neural_network2.1} parent=0
    #allocation3 [shape = 'u8[512]{0}', space=vmem, size = 0x400, scoped, tag = 'output window, operand 0, single buffered']
    #allocation4 [shape = 's32[1]{0}', space=sflag, size = 0x4, scoped, tag = 'scoped memory for neural_network2.1']
    %11 = vsyncpa [#allocation4], 0
    // Predicated region
    $region2: #{neural_network2.1} parent=1 // pred_check
      _
    $region3: #{neural_network2.1} parent=1 // pred_check_branch
      %13 = sbr.rel (0) target = $region5
    $region4: #{neural_network2.1} parent=1 // pred_region
      _
    $region5: #{neural_network2.1} parent=1 // pred_fallthru
      _
    // Predicated region
    $region6: #{neural_network2.1} parent=1 // pred_check
      _
    $region7: #{neural_network2.1} parent=1 // pred_check_branch
      %15 = sbr.rel (0) target = $region9
    $region8: #{neural_network2.1} parent=1 // pred_region
      _
    $region9: #{neural_network2.1} parent=1 // pred_fallthru
      _
    // Predicated region
    $region10: #{neural_network2.1} parent=1 // pred_check
      _
    $region11: #{neural_network2.1} parent=1 // pred_check_branch
      %17 = sbr.rel (0) target = $region13
    $region12: #{neural_network2.1} parent=1 // pred_region
      _
    $region13: #{neural_network2.1} parent=1 // pred_fallthru
      _
    // Predicated region
    $region14: #{neural_network2.1} parent=1 // pred_check
      _
    $region15: #{neural_network2.1} parent=1 // pred_check_branch
      %19 = sbr.rel (0) target = $region17
    $region16: #{neural_network2.1} parent=1 // pred_region
      _
    $region17: #{neural_network2.1} parent=1 // pred_fallthru
      _
    // Predicated region
    $region18: #{neural_network2.1} parent=1 // pred_check
      _
    $region19: #{neural_network2.1} parent=1 // pred_check_branch
      %21 = sbr.rel (0) target = $region21
    $region20: #{neural_network2.1} parent=1 // pred_region
      _
    $region21: #{neural_network2.1} parent=1 // pred_fallthru
      _
    %v22 = vld [vmem:[%s1] sm:$0xff]
    %v23 = vld [vmem:[%s1 + $0x8] sm:$0xff]
    %v24 = vld [vmem:[%s1 + $0x10] sm:$0xff]
    %v25 = vld [vmem:[%s1 + $0x18] sm:$0xff]
    %v26 = vld [vmem:[%s0] sm:$0xff]
    %v27 = vld [vmem:[%s2] sm:$0xff]
    %v28 = vld [vmem:[%s2 + $0x8] sm:$0xff]
    %v29 = vld [vmem:[%s2 + $0x10] sm:$0xff]
    %v30 = vld [vmem:[%s2 + $0x18] sm:$0xff]
    %32 = vset.pattern.permute.xlu0 0
    %33 = vperm.xlu0 %32, %v27
    %v34 = vpop.permute.xlu0 %33
    %37 = vset.pattern.permute.xlu0 0
    %38 = vperm.xlu0 %37, %v28
    %v39 = vpop.permute.xlu0 %38
    %42 = vset.pattern.permute.xlu0 0
    %43 = vperm.xlu0 %42, %v29
    %v44 = vpop.permute.xlu0 %43
    %47 = vset.pattern.permute.xlu0 0
    %48 = vperm.xlu0 %47, %v30
    %v49 = vpop.permute.xlu0 %48
    %vm51 = vcmask 130048
    %v53 = vsel %vm51, %v22, 0
    %v56 = vsel %vm51, %v23, 0
    %v59 = vsel %vm51, %v24, 0
    %v62 = vsel %vm51, %v25, 0
    %v65 = vsel %vm51, %v26, 0
    %67 = vmatprep.subr.mxu0 0.0
    %v68 = vand.u32 %v65, 4294901760
    %69 = vmatpush1.xpose.msra.mxu0 %v68
    %70 = vmatprep.subr.mxu0 0.0
    %71 = vmatpush1.xpose.msra.mxu0 0.0
    %72 = vmatprep.subr.mxu0 0.0
    %73 = vmatpush1.xpose.msra.mxu0 0.0
    %74 = vmatprep.subr.mxu0 0.0
    %75 = vmatpush1.xpose.msra.mxu0 0.0
    %76 = vmatprep.subr.mxu0 0.0
    %77 = vmatpush1.xpose.msra.mxu0 0.0
    %78 = vmatprep.subr.mxu0 0.0
    %79 = vmatpush1.xpose.msra.mxu0 0.0
    %80 = vmatprep.subr.mxu0 0.0
    %81 = vmatpush1.xpose.msra.mxu0 0.0
    %82 = vmatprep.subr.mxu0 0.0
    %83 = vmatpush1.xpose.msra.mxu0 0.0
    %84 = vmatprep.subr.mxu0 0.0
    %85 = vmatpush1.xpose.msra.mxu0 0.0
    %86 = vmatprep.subr.mxu0 0.0
    %87 = vmatpush1.xpose.msra.mxu0 0.0
    %88 = vmatprep.subr.mxu0 0.0
    %89 = vmatpush1.xpose.msra.mxu0 0.0
    %90 = vmatprep.subr.mxu0 0.0
    %91 = vmatpush1.xpose.msra.mxu0 0.0
    %92 = vmatprep.subr.mxu0 0.0
    %93 = vmatpush1.xpose.msra.mxu0 0.0
    %94 = vmatprep.subr.mxu0 0.0
    %95 = vmatpush1.xpose.msra.mxu0 0.0
    %96 = vmatprep.subr.mxu0 0.0
    %97 = vmatpush1.xpose.msra.mxu0 0.0
    %98 = vmatprep.subr.mxu0 0.0
    %99 = vmatpush1.xpose.msra.mxu0 0.0
    %100 = vmatprep.subr.mxu0 0.0
    %101 = vmatpush1.xpose.msra.mxu0 0.0
    %102 = vmatprep.subr.mxu0 0.0
    %103 = vmatpush1.xpose.msra.mxu0 0.0
    %104 = vmatprep.subr.mxu0 0.0
    %105 = vmatpush1.xpose.msra.mxu0 0.0
    %106 = vmatprep.subr.mxu0 0.0
    %107 = vmatpush1.xpose.msra.mxu0 0.0
    %108 = vmatprep.subr.mxu0 0.0
    %109 = vmatpush1.xpose.msra.mxu0 0.0
    %110 = vmatprep.subr.mxu0 0.0
    %111 = vmatpush1.xpose.msra.mxu0 0.0
    %112 = vmatprep.subr.mxu0 0.0
    %113 = vmatpush1.xpose.msra.mxu0 0.0
    %114 = vmatprep.subr.mxu0 0.0
    %115 = vmatpush1.xpose.msra.mxu0 0.0
    %116 = vmatprep.subr.mxu0 0.0
    %117 = vmatpush1.xpose.msra.mxu0 0.0
    %118 = vmatprep.subr.mxu0 0.0
    %119 = vmatpush1.xpose.msra.mxu0 0.0
    %120 = vmatprep.subr.mxu0 0.0
    %121 = vmatpush1.xpose.msra.mxu0 0.0
    %122 = vmatprep.subr.mxu0 0.0
    %123 = vmatpush1.xpose.msra.mxu0 0.0
    %124 = vmatprep.subr.mxu0 0.0
    %125 = vmatpush1.xpose.msra.mxu0 0.0
    %126 = vmatprep.subr.mxu0 0.0
    %127 = vmatpush1.xpose.msra.mxu0 0.0
    %128 = vmatprep.subr.mxu0 0.0
    %129 = vmatpush1.xpose.msra.mxu0 0.0
    %130 = vmatprep.subr.mxu0 0.0
    %131 = vmatpush1.xpose.msra.mxu0 0.0
    %132 = vmatprep.mubr.f32.mxu0 0.0
    %v133 = vand.u32 %v53, 4294901760
    %v134 = vsub.f32 %v53, %v133
    %v135 = vand.u32 %v134, 4294901760
    %v136 = vsub.f32 %v134, %v135
    %v137 = vand.u32 %v136, 4294901760
    %138 = vmatmul.mubr.f32.gmra.mrb[0].mxu0 %v137
    %v139 = vpop.f32.mrb[0].mxu0
    %v140 = vadd.f32 %v34, %v139
    %v141 = vpop.f32.mrb[0].mxu0
    %142 = vmatprep.mubr.f32.mxu0 0.0
    %v143 = vand.u32 %v56, 4294901760
    %v144 = vsub.f32 %v56, %v143
    %v145 = vand.u32 %v144, 4294901760
    %v146 = vsub.f32 %v144, %v145
    %v147 = vand.u32 %v146, 4294901760
    %148 = vmatmul.mubr.f32.gmra.mrb[0].mxu0 %v147
    %v149 = vpop.f32.mrb[0].mxu0
    %v150 = vadd.f32 %v39, %v149
    %v151 = vpop.f32.mrb[0].mxu0
    %152 = vmatprep.mubr.f32.mxu0 0.0
    %v153 = vand.u32 %v59, 4294901760
    %v154 = vsub.f32 %v59, %v153
    %v155 = vand.u32 %v154, 4294901760
    %v156 = vsub.f32 %v154, %v155
    %v157 = vand.u32 %v156, 4294901760
    %158 = vmatmul.mubr.f32.gmra.mrb[0].mxu0 %v157
    %v159 = vpop.f32.mrb[0].mxu0
    %v160 = vadd.f32 %v44, %v159
    %v161 = vpop.f32.mrb[0].mxu0
    %162 = vmatprep.mubr.f32.mxu0 0.0
    %v163 = vand.u32 %v62, 4294901760
    %v164 = vsub.f32 %v62, %v163
    %v165 = vand.u32 %v164, 4294901760
    %v166 = vsub.f32 %v164, %v165
    %v167 = vand.u32 %v166, 4294901760
    %168 = vmatmul.mubr.f32.gmra.mrb[0].mxu0 %v167
    %v169 = vpop.f32.mrb[0].mxu0
    %v170 = vadd.f32 %v49, %v169
    %v171 = vpop.f32.mrb[0].mxu0
    %172 = vdwg.mxu0
    %173 = vmatprep.subr.mxu0 0.0
    %v174 = vand.u32 %v65, 4294901760
    %v175 = vsub.f32 %v65, %v174
    %v176 = vand.u32 %v175, 4294901760
    %v177 = vsub.f32 %v175, %v176
    %v178 = vand.u32 %v177, 4294901760
    %179 = vmatpush1.xpose.msra.mxu0 %v178
    %180 = vmatprep.subr.mxu0 0.0
    %181 = vmatpush1.xpose.msra.mxu0 0.0
    %182 = vmatprep.subr.mxu0 0.0
    %183 = vmatpush1.xpose.msra.mxu0 0.0
    %184 = vmatprep.subr.mxu0 0.0
    %185 = vmatpush1.xpose.msra.mxu0 0.0
    %186 = vmatprep.subr.mxu0 0.0
    %187 = vmatpush1.xpose.msra.mxu0 0.0
    %188 = vmatprep.subr.mxu0 0.0
    %189 = vmatpush1.xpose.msra.mxu0 0.0
    %190 = vmatprep.subr.mxu0 0.0
    %191 = vmatpush1.xpose.msra.mxu0 0.0
    %192 = vmatprep.subr.mxu0 0.0
    %193 = vmatpush1.xpose.msra.mxu0 0.0
    %194 = vmatprep.subr.mxu0 0.0
    %195 = vmatpush1.xpose.msra.mxu0 0.0
    %196 = vmatprep.subr.mxu0 0.0
    %197 = vmatpush1.xpose.msra.mxu0 0.0
    %198 = vmatprep.subr.mxu0 0.0
    %199 = vmatpush1.xpose.msra.mxu0 0.0
    %200 = vmatprep.subr.mxu0 0.0
    %201 = vmatpush1.xpose.msra.mxu0 0.0
    %202 = vmatprep.subr.mxu0 0.0
    %203 = vmatpush1.xpose.msra.mxu0 0.0
    %204 = vmatprep.subr.mxu0 0.0
    %205 = vmatpush1.xpose.msra.mxu0 0.0
    %206 = vmatprep.subr.mxu0 0.0
    %207 = vmatpush1.xpose.msra.mxu0 0.0
    %208 = vmatprep.subr.mxu0 0.0
    %209 = vmatpush1.xpose.msra.mxu0 0.0
    %210 = vmatprep.subr.mxu0 0.0
    %211 = vmatpush1.xpose.msra.mxu0 0.0
    %212 = vmatprep.subr.mxu0 0.0
    %213 = vmatpush1.xpose.msra.mxu0 0.0
    %214 = vmatprep.subr.mxu0 0.0
    %215 = vmatpush1.xpose.msra.mxu0 0.0
    %216 = vmatprep.subr.mxu0 0.0
    %217 = vmatpush1.xpose.msra.mxu0 0.0
    %218 = vmatprep.subr.mxu0 0.0
    %219 = vmatpush1.xpose.msra.mxu0 0.0
    %220 = vmatprep.subr.mxu0 0.0
    %221 = vmatpush1.xpose.msra.mxu0 0.0
    %222 = vmatprep.subr.mxu0 0.0
    %223 = vmatpush1.xpose.msra.mxu0 0.0
    %224 = vmatprep.subr.mxu0 0.0
    %225 = vmatpush1.xpose.msra.mxu0 0.0
    %226 = vmatprep.subr.mxu0 0.0
    %227 = vmatpush1.xpose.msra.mxu0 0.0
    %228 = vmatprep.subr.mxu0 0.0
    %229 = vmatpush1.xpose.msra.mxu0 0.0
    %230 = vmatprep.subr.mxu0 0.0
    %231 = vmatpush1.xpose.msra.mxu0 0.0
    %232 = vmatprep.subr.mxu0 0.0
    %233 = vmatpush1.xpose.msra.mxu0 0.0
    %234 = vmatprep.subr.mxu0 0.0
    %235 = vmatpush1.xpose.msra.mxu0 0.0
    %236 = vmatprep.subr.mxu0 0.0
    %237 = vmatpush1.xpose.msra.mxu0 0.0
    %238 = vmatprep.subr.mxu0 0.0
    %239 = vmatpush1.xpose.msra.mxu0 0.0
    %240 = vmatprep.subr.mxu0 0.0
    %241 = vmatpush1.xpose.msra.mxu0 0.0
    %242 = vmatprep.mubr.f32.mxu0 0.0
    %v243 = vand.u32 %v53, 4294901760
    %244 = vmatmul.mubr.f32.gmra.mrb[0].mxu0 %v243
    %v245 = vpop.f32.mrb[0].mxu0
    %v246 = vadd.f32 %v140, %v245
    %v247 = vpop.f32.mrb[0].mxu0
    %248 = vmatprep.mubr.f32.mxu0 0.0
    %v249 = vand.u32 %v56, 4294901760
    %250 = vmatmul.mubr.f32.gmra.mrb[0].mxu0 %v249
    %v251 = vpop.f32.mrb[0].mxu0
    %v252 = vadd.f32 %v150, %v251
    %v253 = vpop.f32.mrb[0].mxu0
    %254 = vmatprep.mubr.f32.mxu0 0.0
    %v255 = vand.u32 %v59, 4294901760
    %256 = vmatmul.mubr.f32.gmra.mrb[0].mxu0 %v255
    %v257 = vpop.f32.mrb[0].mxu0
    %v258 = vadd.f32 %v160, %v257
    %v259 = vpop.f32.mrb[0].mxu0
    %260 = vmatprep.mubr.f32.mxu0 0.0
    %v261 = vand.u32 %v62, 4294901760
    %262 = vmatmul.mubr.f32.gmra.mrb[0].mxu0 %v261
    %v263 = vpop.f32.mrb[0].mxu0
    %v264 = vadd.f32 %v170, %v263
    %v265 = vpop.f32.mrb[0].mxu0
    %266 = vdwg.mxu0
    %267 = vmatprep.subr.mxu0 0.0
    %v268 = vand.u32 %v65, 4294901760
    %v269 = vsub.f32 %v65, %v268
    %270 = vmatpush1.xpose.msra.mxu0 %v269
    %271 = vmatprep.subr.mxu0 0.0
    %272 = vmatpush1.xpose.msra.mxu0 0.0
    %273 = vmatprep.subr.mxu0 0.0
    %274 = vmatpush1.xpose.msra.mxu0 0.0
    %275 = vmatprep.subr.mxu0 0.0
    %276 = vmatpush1.xpose.msra.mxu0 0.0
    %277 = vmatprep.subr.mxu0 0.0
    %278 = vmatpush1.xpose.msra.mxu0 0.0
    %279 = vmatprep.subr.mxu0 0.0
    %280 = vmatpush1.xpose.msra.mxu0 0.0
    %281 = vmatprep.subr.mxu0 0.0
    %282 = vmatpush1.xpose.msra.mxu0 0.0
    %283 = vmatprep.subr.mxu0 0.0
    %284 = vmatpush1.xpose.msra.mxu0 0.0
    %285 = vmatprep.subr.mxu0 0.0
    %286 = vmatpush1.xpose.msra.mxu0 0.0
    %287 = vmatprep.subr.mxu0 0.0
    %288 = vmatpush1.xpose.msra.mxu0 0.0
    %289 = vmatprep.subr.mxu0 0.0
    %290 = vmatpush1.xpose.msra.mxu0 0.0
    %291 = vmatprep.subr.mxu0 0.0
    %292 = vmatpush1.xpose.msra.mxu0 0.0
    %293 = vmatprep.subr.mxu0 0.0
    %294 = vmatpush1.xpose.msra.mxu0 0.0
    %295 = vmatprep.subr.mxu0 0.0
    %296 = vmatpush1.xpose.msra.mxu0 0.0
    %297 = vmatprep.subr.mxu0 0.0
    %298 = vmatpush1.xpose.msra.mxu0 0.0
    %299 = vmatprep.subr.mxu0 0.0
    %300 = vmatpush1.xpose.msra.mxu0 0.0
    %301 = vmatprep.subr.mxu0 0.0
    %302 = vmatpush1.xpose.msra.mxu0 0.0
    %303 = vmatprep.subr.mxu0 0.0
    %304 = vmatpush1.xpose.msra.mxu0 0.0
    %305 = vmatprep.subr.mxu0 0.0
    %306 = vmatpush1.xpose.msra.mxu0 0.0
    %307 = vmatprep.subr.mxu0 0.0
    %308 = vmatpush1.xpose.msra.mxu0 0.0
    %309 = vmatprep.subr.mxu0 0.0
    %310 = vmatpush1.xpose.msra.mxu0 0.0
    %311 = vmatprep.subr.mxu0 0.0
    %312 = vmatpush1.xpose.msra.mxu0 0.0
    %313 = vmatprep.subr.mxu0 0.0
    %314 = vmatpush1.xpose.msra.mxu0 0.0
    %315 = vmatprep.subr.mxu0 0.0
    %316 = vmatpush1.xpose.msra.mxu0 0.0
    %317 = vmatprep.subr.mxu0 0.0
    %318 = vmatpush1.xpose.msra.mxu0 0.0
    %319 = vmatprep.subr.mxu0 0.0
    %320 = vmatpush1.xpose.msra.mxu0 0.0
    %321 = vmatprep.subr.mxu0 0.0
    %322 = vmatpush1.xpose.msra.mxu0 0.0
    %323 = vmatprep.subr.mxu0 0.0
    %324 = vmatpush1.xpose.msra.mxu0 0.0
    %325 = vmatprep.subr.mxu0 0.0
    %326 = vmatpush1.xpose.msra.mxu0 0.0
    %327 = vmatprep.subr.mxu0 0.0
    %328 = vmatpush1.xpose.msra.mxu0 0.0
    %329 = vmatprep.subr.mxu0 0.0
    %330 = vmatpush1.xpose.msra.mxu0 0.0
    %331 = vmatprep.subr.mxu0 0.0
    %332 = vmatpush1.xpose.msra.mxu0 0.0
    %333 = vmatprep.mubr.f32.mxu0 0.0
    %v334 = vand.u32 %v53, 4294901760
    %v335 = vsub.f32 %v53, %v334
    %336 = vmatmul.mubr.f32.gmra.mrb[0].mxu0 %v335
    %v337 = vpop.f32.mrb[0].mxu0
    %v338 = vadd.f32 %v246, %v337
    %v339 = vpop.f32.mrb[0].mxu0
    %340 = vmatprep.mubr.f32.mxu0 0.0
    %v341 = vand.u32 %v56, 4294901760
    %v342 = vsub.f32 %v56, %v341
    %343 = vmatmul.mubr.f32.gmra.mrb[0].mxu0 %v342
    %v344 = vpop.f32.mrb[0].mxu0
    %v345 = vadd.f32 %v252, %v344
    %v346 = vpop.f32.mrb[0].mxu0
    %347 = vmatprep.mubr.f32.mxu0 0.0
    %v348 = vand.u32 %v59, 4294901760
    %v349 = vsub.f32 %v59, %v348
    %350 = vmatmul.mubr.f32.gmra.mrb[0].mxu0 %v349
    %v351 = vpop.f32.mrb[0].mxu0
    %v352 = vadd.f32 %v258, %v351
    %v353 = vpop.f32.mrb[0].mxu0
    %354 = vmatprep.mubr.f32.mxu0 0.0
    %v355 = vand.u32 %v62, 4294901760
    %v356 = vsub.f32 %v62, %v355
    %357 = vmatmul.mubr.f32.gmra.mrb[0].mxu0 %v356
    %v358 = vpop.f32.mrb[0].mxu0
    %v359 = vadd.f32 %v264, %v358
    %v360 = vpop.f32.mrb[0].mxu0
    %361 = vdwg.mxu0
    %362 = vmatprep.subr.mxu0 0.0
    %v363 = vand.u32 %v65, 4294901760
    %364 = vmatpush1.xpose.msra.mxu0 %v363
    %365 = vmatprep.subr.mxu0 0.0
    %366 = vmatpush1.xpose.msra.mxu0 0.0
    %367 = vmatprep.subr.mxu0 0.0
    %368 = vmatpush1.xpose.msra.mxu0 0.0
    %369 = vmatprep.subr.mxu0 0.0
    %370 = vmatpush1.xpose.msra.mxu0 0.0
    %371 = vmatprep.subr.mxu0 0.0
    %372 = vmatpush1.xpose.msra.mxu0 0.0
    %373 = vmatprep.subr.mxu0 0.0
    %374 = vmatpush1.xpose.msra.mxu0 0.0
    %375 = vmatprep.subr.mxu0 0.0
    %376 = vmatpush1.xpose.msra.mxu0 0.0
    %377 = vmatprep.subr.mxu0 0.0
    %378 = vmatpush1.xpose.msra.mxu0 0.0
    %379 = vmatprep.subr.mxu0 0.0
    %380 = vmatpush1.xpose.msra.mxu0 0.0
    %381 = vmatprep.subr.mxu0 0.0
    %382 = vmatpush1.xpose.msra.mxu0 0.0
    %383 = vmatprep.subr.mxu0 0.0
    %384 = vmatpush1.xpose.msra.mxu0 0.0
    %385 = vmatprep.subr.mxu0 0.0
    %386 = vmatpush1.xpose.msra.mxu0 0.0
    %387 = vmatprep.subr.mxu0 0.0
    %388 = vmatpush1.xpose.msra.mxu0 0.0
    %389 = vmatprep.subr.mxu0 0.0
    %390 = vmatpush1.xpose.msra.mxu0 0.0
    %391 = vmatprep.subr.mxu0 0.0
    %392 = vmatpush1.xpose.msra.mxu0 0.0
    %393 = vmatprep.subr.mxu0 0.0
    %394 = vmatpush1.xpose.msra.mxu0 0.0
    %395 = vmatprep.subr.mxu0 0.0
    %396 = vmatpush1.xpose.msra.mxu0 0.0
    %397 = vmatprep.subr.mxu0 0.0
    %398 = vmatpush1.xpose.msra.mxu0 0.0
    %399 = vmatprep.subr.mxu0 0.0
    %400 = vmatpush1.xpose.msra.mxu0 0.0
    %401 = vmatprep.subr.mxu0 0.0
    %402 = vmatpush1.xpose.msra.mxu0 0.0
    %403 = vmatprep.subr.mxu0 0.0
    %404 = vmatpush1.xpose.msra.mxu0 0.0
    %405 = vmatprep.subr.mxu0 0.0
    %406 = vmatpush1.xpose.msra.mxu0 0.0
    %407 = vmatprep.subr.mxu0 0.0
    %408 = vmatpush1.xpose.msra.mxu0 0.0
    %409 = vmatprep.subr.mxu0 0.0
    %410 = vmatpush1.xpose.msra.mxu0 0.0
    %411 = vmatprep.subr.mxu0 0.0
    %412 = vmatpush1.xpose.msra.mxu0 0.0
    %413 = vmatprep.subr.mxu0 0.0
    %414 = vmatpush1.xpose.msra.mxu0 0.0
    %415 = vmatprep.subr.mxu0 0.0
    %416 = vmatpush1.xpose.msra.mxu0 0.0
    %417 = vmatprep.subr.mxu0 0.0
    %418 = vmatpush1.xpose.msra.mxu0 0.0
    %419 = vmatprep.subr.mxu0 0.0
    %420 = vmatpush1.xpose.msra.mxu0 0.0
    %421 = vmatprep.subr.mxu0 0.0
    %422 = vmatpush1.xpose.msra.mxu0 0.0
    %423 = vmatprep.subr.mxu0 0.0
    %424 = vmatpush1.xpose.msra.mxu0 0.0
    %425 = vmatprep.subr.mxu0 0.0
    %426 = vmatpush1.xpose.msra.mxu0 0.0
    %427 = vmatprep.mubr.f32.mxu0 0.0
    %v428 = vand.u32 %v53, 4294901760
    %v429 = vsub.f32 %v53, %v428
    %v430 = vand.u32 %v429, 4294901760
    %431 = vmatmul.mubr.f32.gmra.mrb[0].mxu0 %v430
    %v432 = vpop.f32.mrb[0].mxu0
    %v433 = vadd.f32 %v338, %v432
    %v434 = vpop.f32.mrb[0].mxu0
    %435 = vmatprep.mubr.f32.mxu0 0.0
    %v436 = vand.u32 %v56, 4294901760
    %v437 = vsub.f32 %v56, %v436
    %v438 = vand.u32 %v437, 4294901760
    %439 = vmatmul.mubr.f32.gmra.mrb[0].mxu0 %v438
    %v440 = vpop.f32.mrb[0].mxu0
    %v441 = vadd.f32 %v345, %v440
    %v442 = vpop.f32.mrb[0].mxu0
    %443 = vmatprep.mubr.f32.mxu0 0.0
    %v444 = vand.u32 %v59, 4294901760
    %v445 = vsub.f32 %v59, %v444
    %v446 = vand.u32 %v445, 4294901760
    %447 = vmatmul.mubr.f32.gmra.mrb[0].mxu0 %v446
    %v448 = vpop.f32.mrb[0].mxu0
    %v449 = vadd.f32 %v352, %v448
    %v450 = vpop.f32.mrb[0].mxu0
    %451 = vmatprep.mubr.f32.mxu0 0.0
    %v452 = vand.u32 %v62, 4294901760
    %v453 = vsub.f32 %v62, %v452
    %v454 = vand.u32 %v453, 4294901760
    %455 = vmatmul.mubr.f32.gmra.mrb[0].mxu0 %v454
    %v456 = vpop.f32.mrb[0].mxu0
    %v457 = vadd.f32 %v359, %v456
    %v458 = vpop.f32.mrb[0].mxu0
    %459 = vdwg.mxu0
    %460 = vmatprep.subr.mxu0 0.0
    %v461 = vand.u32 %v65, 4294901760
    %v462 = vsub.f32 %v65, %v461
    %v463 = vand.u32 %v462, 4294901760
    %464 = vmatpush1.xpose.msra.mxu0 %v463
    %465 = vmatprep.subr.mxu0 0.0
    %466 = vmatpush1.xpose.msra.mxu0 0.0
    %467 = vmatprep.subr.mxu0 0.0
    %468 = vmatpush1.xpose.msra.mxu0 0.0
    %469 = vmatprep.subr.mxu0 0.0
    %470 = vmatpush1.xpose.msra.mxu0 0.0
    %471 = vmatprep.subr.mxu0 0.0
    %472 = vmatpush1.xpose.msra.mxu0 0.0
    %473 = vmatprep.subr.mxu0 0.0
    %474 = vmatpush1.xpose.msra.mxu0 0.0
    %475 = vmatprep.subr.mxu0 0.0
    %476 = vmatpush1.xpose.msra.mxu0 0.0
    %477 = vmatprep.subr.mxu0 0.0
    %478 = vmatpush1.xpose.msra.mxu0 0.0
    %479 = vmatprep.subr.mxu0 0.0
    %480 = vmatpush1.xpose.msra.mxu0 0.0
    %481 = vmatprep.subr.mxu0 0.0
    %482 = vmatpush1.xpose.msra.mxu0 0.0
    %483 = vmatprep.subr.mxu0 0.0
    %484 = vmatpush1.xpose.msra.mxu0 0.0
    %485 = vmatprep.subr.mxu0 0.0
    %486 = vmatpush1.xpose.msra.mxu0 0.0
    %487 = vmatprep.subr.mxu0 0.0
    %488 = vmatpush1.xpose.msra.mxu0 0.0
    %489 = vmatprep.subr.mxu0 0.0
    %490 = vmatpush1.xpose.msra.mxu0 0.0
    %491 = vmatprep.subr.mxu0 0.0
    %492 = vmatpush1.xpose.msra.mxu0 0.0
    %493 = vmatprep.subr.mxu0 0.0
    %494 = vmatpush1.xpose.msra.mxu0 0.0
    %495 = vmatprep.subr.mxu0 0.0
    %496 = vmatpush1.xpose.msra.mxu0 0.0
    %497 = vmatprep.subr.mxu0 0.0
    %498 = vmatpush1.xpose.msra.mxu0 0.0
    %499 = vmatprep.subr.mxu0 0.0
    %500 = vmatpush1.xpose.msra.mxu0 0.0
    %501 = vmatprep.subr.mxu0 0.0
    %502 = vmatpush1.xpose.msra.mxu0 0.0
    %503 = vmatprep.subr.mxu0 0.0
    %504 = vmatpush1.xpose.msra.mxu0 0.0
    %505 = vmatprep.subr.mxu0 0.0
    %506 = vmatpush1.xpose.msra.mxu0 0.0
    %507 = vmatprep.subr.mxu0 0.0
    %508 = vmatpush1.xpose.msra.mxu0 0.0
    %509 = vmatprep.subr.mxu0 0.0
    %510 = vmatpush1.xpose.msra.mxu0 0.0
    %511 = vmatprep.subr.mxu0 0.0
    %512 = vmatpush1.xpose.msra.mxu0 0.0
    %513 = vmatprep.subr.mxu0 0.0
    %514 = vmatpush1.xpose.msra.mxu0 0.0
    %515 = vmatprep.subr.mxu0 0.0
    %516 = vmatpush1.xpose.msra.mxu0 0.0
    %517 = vmatprep.subr.mxu0 0.0
    %518 = vmatpush1.xpose.msra.mxu0 0.0
    %519 = vmatprep.subr.mxu0 0.0
    %520 = vmatpush1.xpose.msra.mxu0 0.0
    %521 = vmatprep.subr.mxu0 0.0
    %522 = vmatpush1.xpose.msra.mxu0 0.0
    %523 = vmatprep.subr.mxu0 0.0
    %524 = vmatpush1.xpose.msra.mxu0 0.0
    %525 = vmatprep.subr.mxu0 0.0
    %526 = vmatpush1.xpose.msra.mxu0 0.0
    %527 = vmatprep.mubr.f32.mxu0 0.0
    %v528 = vand.u32 %v53, 4294901760
    %529 = vmatmul.mubr.f32.gmra.mrb[0].mxu0 %v528
    %v530 = vpop.f32.mrb[0].mxu0
    %v531 = vadd.f32 %v433, %v530
    %v532 = vpop.f32.mrb[0].mxu0
    %533 = vmatprep.mubr.f32.mxu0 0.0
    %v534 = vand.u32 %v56, 4294901760
    %535 = vmatmul.mubr.f32.gmra.mrb[0].mxu0 %v534
    %v536 = vpop.f32.mrb[0].mxu0
    %v537 = vadd.f32 %v441, %v536
    %v538 = vpop.f32.mrb[0].mxu0
    %539 = vmatprep.mubr.f32.mxu0 0.0
    %v540 = vand.u32 %v59, 4294901760
    %541 = vmatmul.mubr.f32.gmra.mrb[0].mxu0 %v540
    %v542 = vpop.f32.mrb[0].mxu0
    %v543 = vadd.f32 %v449, %v542
    %v544 = vpop.f32.mrb[0].mxu0
    %545 = vmatprep.mubr.f32.mxu0 0.0
    %v546 = vand.u32 %v62, 4294901760
    %547 = vmatmul.mubr.f32.gmra.mrb[0].mxu0 %v546
    %v548 = vpop.f32.mrb[0].mxu0
    %v549 = vadd.f32 %v457, %v548
    %v550 = vpop.f32.mrb[0].mxu0
    %551 = vdwg.mxu0
    %552 = vmatprep.subr.mxu0 0.0
    %v553 = vand.u32 %v65, 4294901760
    %554 = vmatpush1.xpose.msra.mxu0 %v553
    %555 = vmatprep.subr.mxu0 0.0
    %556 = vmatpush1.xpose.msra.mxu0 0.0
    %557 = vmatprep.subr.mxu0 0.0
    %558 = vmatpush1.xpose.msra.mxu0 0.0
    %559 = vmatprep.subr.mxu0 0.0
    %560 = vmatpush1.xpose.msra.mxu0 0.0
    %561 = vmatprep.subr.mxu0 0.0
    %562 = vmatpush1.xpose.msra.mxu0 0.0
    %563 = vmatprep.subr.mxu0 0.0
    %564 = vmatpush1.xpose.msra.mxu0 0.0
    %565 = vmatprep.subr.mxu0 0.0
    %566 = vmatpush1.xpose.msra.mxu0 0.0
    %567 = vmatprep.subr.mxu0 0.0
    %568 = vmatpush1.xpose.msra.mxu0 0.0
    %569 = vmatprep.subr.mxu0 0.0
    %570 = vmatpush1.xpose.msra.mxu0 0.0
    %571 = vmatprep.subr.mxu0 0.0
    %572 = vmatpush1.xpose.msra.mxu0 0.0
    %573 = vmatprep.subr.mxu0 0.0
    %574 = vmatpush1.xpose.msra.mxu0 0.0
    %575 = vmatprep.subr.mxu0 0.0
    %576 = vmatpush1.xpose.msra.mxu0 0.0
    %577 = vmatprep.subr.mxu0 0.0
    %578 = vmatpush1.xpose.msra.mxu0 0.0
    %579 = vmatprep.subr.mxu0 0.0
    %580 = vmatpush1.xpose.msra.mxu0 0.0
    %581 = vmatprep.subr.mxu0 0.0
    %582 = vmatpush1.xpose.msra.mxu0 0.0
    %583 = vmatprep.subr.mxu0 0.0
    %584 = vmatpush1.xpose.msra.mxu0 0.0
    %585 = vmatprep.subr.mxu0 0.0
    %586 = vmatpush1.xpose.msra.mxu0 0.0
    %587 = vmatprep.subr.mxu0 0.0
    %588 = vmatpush1.xpose.msra.mxu0 0.0
    %589 = vmatprep.subr.mxu0 0.0
    %590 = vmatpush1.xpose.msra.mxu0 0.0
    %591 = vmatprep.subr.mxu0 0.0
    %592 = vmatpush1.xpose.msra.mxu0 0.0
    %593 = vmatprep.subr.mxu0 0.0
    %594 = vmatpush1.xpose.msra.mxu0 0.0
    %595 = vmatprep.subr.mxu0 0.0
    %596 = vmatpush1.xpose.msra.mxu0 0.0
    %597 = vmatprep.subr.mxu0 0.0
    %598 = vmatpush1.xpose.msra.mxu0 0.0
    %599 = vmatprep.subr.mxu0 0.0
    %600 = vmatpush1.xpose.msra.mxu0 0.0
    %601 = vmatprep.subr.mxu0 0.0
    %602 = vmatpush1.xpose.msra.mxu0 0.0
    %603 = vmatprep.subr.mxu0 0.0
    %604 = vmatpush1.xpose.msra.mxu0 0.0
    %605 = vmatprep.subr.mxu0 0.0
    %606 = vmatpush1.xpose.msra.mxu0 0.0
    %607 = vmatprep.subr.mxu0 0.0
    %608 = vmatpush1.xpose.msra.mxu0 0.0
    %609 = vmatprep.subr.mxu0 0.0
    %610 = vmatpush1.xpose.msra.mxu0 0.0
    %611 = vmatprep.subr.mxu0 0.0
    %612 = vmatpush1.xpose.msra.mxu0 0.0
    %613 = vmatprep.subr.mxu0 0.0
    %614 = vmatpush1.xpose.msra.mxu0 0.0
    %615 = vmatprep.subr.mxu0 0.0
    %616 = vmatpush1.xpose.msra.mxu0 0.0
    %617 = vmatprep.mubr.f32.mxu0 0.0
    %v618 = vand.u32 %v53, 4294901760
    %619 = vmatmul.mubr.f32.gmra.mrb[0].mxu0 %v618
    %v620 = vpop.f32.mrb[0].mxu0
    %v621 = vadd.f32 %v531, %v620
    %v622 = vpop.f32.mrb[0].mxu0
    %623 = vmatprep.mubr.f32.mxu0 0.0
    %v624 = vand.u32 %v56, 4294901760
    %625 = vmatmul.mubr.f32.gmra.mrb[0].mxu0 %v624
    %v626 = vpop.f32.mrb[0].mxu0
    %v627 = vadd.f32 %v537, %v626
    %v628 = vpop.f32.mrb[0].mxu0
    %629 = vmatprep.mubr.f32.mxu0 0.0
    %v630 = vand.u32 %v59, 4294901760
    %631 = vmatmul.mubr.f32.gmra.mrb[0].mxu0 %v630
    %v632 = vpop.f32.mrb[0].mxu0
    %v633 = vadd.f32 %v543, %v632
    %v634 = vpop.f32.mrb[0].mxu0
    %635 = vmatprep.mubr.f32.mxu0 0.0
    %v636 = vand.u32 %v62, 4294901760
    %637 = vmatmul.mubr.f32.gmra.mrb[0].mxu0 %v636
    %v638 = vpop.f32.mrb[0].mxu0
    %v639 = vadd.f32 %v549, %v638
    %v640 = vpop.f32.mrb[0].mxu0
    %641 = vdwg.mxu0
    %v642 = vmax.f32 %v621, 0.0
    %v643 = vmax.f32 %v627, 0.0
    %v644 = vmax.f32 %v633, 0.0
    %v645 = vmax.f32 %v639, 0.0
    %v646 = vld [vmem:[%s3] sm:$0xff]
    %v647 = vld [vmem:[%s3 + $0x8] sm:$0xff]
    %v648 = vld [vmem:[%s3 + $0x10] sm:$0xff]
    %v649 = vld [vmem:[%s3 + $0x18] sm:$0xff]
    %651 = vset.pattern.permute.xlu0 0
    %652 = vperm.xlu0 %651, %v646
    %v653 = vpop.permute.xlu0 %652
    %656 = vset.pattern.permute.xlu0 0
    %657 = vperm.xlu0 %656, %v647
    %v658 = vpop.permute.xlu0 %657
    %661 = vset.pattern.permute.xlu0 0
    %662 = vperm.xlu0 %661, %v648
    %v663 = vpop.permute.xlu0 %662
    %666 = vset.pattern.permute.xlu0 0
    %667 = vperm.xlu0 %666, %v649
    %v668 = vpop.permute.xlu0 %667
    %v670 = vmul.f32 %v642, %v653
    %v671 = vmul.f32 %v643, %v658
    %v672 = vmul.f32 %v644, %v663
    %v673 = vmul.f32 %v645, %v668
    %vm674 = vcmask 64512
    %v675 = vsel %vm674, %v670, 0.0
    %v676 = vsel %vm674, %v671, 0.0
    %v677 = vadd.f32 %v675, %v676
    %v678 = vsel %vm674, %v672, 0.0
    %v679 = vadd.f32 %v677, %v678
    %v680 = vsel %vm674, %v673, 0.0
    %v681 = vadd.f32 %v679, %v680
    %v682 = vrot.slane %v681, 4
    %v683 = vadd.f32 %v681, %v682
    %v684 = vrot.slane %v683, 2
    %v685 = vadd.f32 %v683, %v684
    %v686 = vrot.slane %v685, 1
    %v687 = vadd.f32 %v685, %v686
    %s688 = sld [smem:[#allocation2]]
    %v689 = vstv %s688
    %v690 = vadd.f32 %v687, %v689
    %v691 = vxor.u32 %v690, 2147483648
    %v692 = vmul.f32 %v691, 1.442695
    %v693 = vpow.pop %v692
    %v694 = vadd.f32 %v693, 1.0
    %v695 = vrcp.pop %v694
    %v696 = vmul.f32 1.0, %v695
    %vm697 = vcmask 57344
    %698 = vst.msk [vmem:[#allocation3] sm:$0x1] %vm697, %v696
    // Predicated region
    $region22: #{neural_network2.1} parent=1 // pred_check
      _
    $region23: #{neural_network2.1} parent=1 // pred_check_branch
      %700 = sbr.rel (0) target = $region25
    $region24: #{neural_network2.1} parent=1 // pred_region
      %s702 = ssub.s32 16, 16
      %703 = vsyncadd [#allocation4], %s702
      %s705 = sshll.u32 [#allocation3], 4
      %s706 = int_to_ptr.vmem [resolvable:$true] %s705
      %708 = dma.vmem_to_hbm [thread:$0]  %s706, 16, %s5, [#allocation4]
    $region25: #{neural_network2.1} parent=1 // pred_fallthru
      _
    // Predicated region
    $region26: #{neural_network2.1} parent=1 // pred_check
      _
    $region27: #{neural_network2.1} parent=1 // pred_check_branch
      %710 = sbr.rel (0) target = $region29
    $region28: #{neural_network2.1} parent=1 // pred_region
      %711 = dma.done [#allocation4], 16
    $region29: #{neural_network2.1} parent=1 // pred_fallthru
      _
    %712 = vsyncpa [#allocation4], 1

</llo_original>
